<compile_context>
chip_gen: v7x
topology: tpu7x:2x2x1
jax: 0.10.0
libtpu: 0.0.40
codegen_flags: <defaults>
</compile_context>

<pallas_src>
import functools
import math

import jax
import jax.numpy as jnp
from jax.experimental import pallas as pl
from jax.experimental.pallas import tpu as pltpu

HIDDEN = 128
LANE = 128
SUBLANE = 8


def _round_up(x, m):
    return (x + m - 1) // m * m


def dqn_kernel(x_ref, w_ref, b_ref, out_ref, *, k_pad):
    # w_ref: (k_pad + 2*HIDDEN, 128) bf16 — [w1; w2; w3] packed row-wise.
    # b_ref: (8, 128) f32 — rows 0/1/2 hold b1/b2/b3.
    # Both are VMEM-resident across all grid steps (constant index_map).
    x = x_ref[...].astype(jnp.bfloat16)                     # (TB, k_pad)

    w1 = w_ref[0:k_pad, :]                                  # (k_pad, 128) bf16
    w2 = w_ref[k_pad:k_pad + HIDDEN, :]                     # (128, 128)  bf16
    w3 = w_ref[k_pad + HIDDEN:k_pad + 2 * HIDDEN, :]        # (128, 128)  bf16

    b1 = b_ref[0:1, :]                                      # (1, 128) f32
    b2 = b_ref[1:2, :]
    b3 = b_ref[2:3, :]

    # bf16 x bf16 -> single-pass MXU matmuls with f32 accumulation.
    h1 = jnp.maximum(jnp.dot(x, w1, preferred_element_type=jnp.float32) + b1, 0.0)
    h2 = jnp.maximum(
        jnp.dot(h1.astype(jnp.bfloat16), w2, preferred_element_type=jnp.float32) + b2,
        0.0)
    q = jnp.dot(h2.astype(jnp.bfloat16), w3, preferred_element_type=jnp.float32) + b3

    # Lane-dense store: full 128-wide block (padded action columns are zero).
    out_ref[...] = q
    # TODO(synk): fuse the RL consumer (greedy argmax for action selection or
    # Q[a] gather for the TD loss) here — masking padded columns >= n_actions
    # to -inf — instead of writing the padded Q tensor back to HBM.


@functools.partial(jax.jit, static_argnames=("n_actions", "max_tile_b"))
def dqn_forward(x, params, n_actions, max_tile_b=512):
    """x: (B, n_obs) f32 (or pre-padded (B, k_pad)). params: packed slabs."""
    w, b = params["w_packed"], params["b_packed"]
    B, K = x.shape
    k_pad = w.shape[0] - 2 * HIDDEN
    n_pad = w.shape[1]

    # Single fat tile for typical replay-minibatch sizes (launch-bound kernel);
    # only tile the batch once it exceeds max_tile_b rows.
    tile_b = min(max_tile_b, _round_up(B, SUBLANE))
    B_pad = _round_up(B, tile_b)
    if (B_pad != B) or (K != k_pad):
        x = jnp.pad(x, ((0, B_pad - B), (0, k_pad - K)))

    grid = (B_pad // tile_b,)

    flops = 2 * B_pad * (k_pad * HIDDEN + HIDDEN * HIDDEN + HIDDEN * n_pad)
    bytes_accessed = (
        x.size * x.dtype.itemsize
        + w.size * w.dtype.itemsize
        + b.size * b.dtype.itemsize
        + B_pad * n_pad * 4
    )

    q_pad = pl.pallas_call(
        functools.partial(dqn_kernel, k_pad=k_pad),
        out_shape=jax.ShapeDtypeStruct((B_pad, n_pad), jnp.float32),
        grid=grid,
        in_specs=[
            pl.BlockSpec((tile_b, k_pad), lambda i: (i, 0)),
            pl.BlockSpec(w.shape, lambda i: (0, 0)),  # weight slab: fetched once
            pl.BlockSpec(b.shape, lambda i: (0, 0)),  # bias slab:   fetched once
        ],
        out_specs=pl.BlockSpec((tile_b, n_pad), lambda i: (i, 0)),
        compiler_params=pltpu.CompilerParams(
            dimension_semantics=("parallel",),  # only >1 step for B > max_tile_b
        ),
        cost_estimate=pl.CostEstimate(
            flops=flops, transcendentals=0, bytes_accessed=bytes_accessed),
    )(x, w, b)

    return q_pad[:B, :n_actions]


def init_params(key, n_observations, n_actions, hidden=HIDDEN):
    """nn.Linear-style init (U[-1/sqrt(fan_in), +bound]), weights stored
    pre-transposed (in, out), zero-padded to TPU-friendly shapes, and packed
    into a single bf16 weight slab + a single f32 bias slab (2 resident DMAs)."""
    assert hidden == HIDDEN
    k_pad = _round_up(max(n_observations, SUBLANE), SUBLANE)   # 4 -> 8
    n_pad = _round_up(max(n_actions, LANE), LANE)              # 2 -> 128
    ks = jax.random.split(key, 6)

    def linear(kw, kb, fan_in, fan_out, in_pad, out_pad):
        bound = 1.0 / math.sqrt(fan_in)
        w = jax.random.uniform(kw, (fan_in, fan_out), jnp.float32, -bound, bound)
        bias = jax.random.uniform(kb, (fan_out,), jnp.float32, -bound, bound)
        w = jnp.pad(w, ((0, in_pad - fan_in), (0, out_pad - fan_out)))
        bias = jnp.pad(bias, (0, out_pad - fan_out))
        return w, bias

    w1, b1 = linear(ks[0], ks[1], n_observations, hidden, k_pad, hidden)
    w2, b2 = linear(ks[2], ks[3], hidden, hidden, hidden, hidden)
    w3, b3 = linear(ks[4], ks[5], hidden, n_actions, hidden, n_pad)

    w_packed = jnp.concatenate([w1, w2, w3], axis=0).astype(jnp.bfloat16)
    b_packed = jnp.zeros((SUBLANE, LANE), jnp.float32)
    b_packed = b_packed.at[0].set(b1).at[1].set(b2).at[2].set(b3)
    return {"w_packed": w_packed, "b_packed": b_packed}


def dqn_reference(x, params, n_actions):
    """Pure-JAX reference mirroring the kernel's bf16-in / f32-accumulate math."""
    w, b = params["w_packed"], params["b_packed"]
    k_pad = w.shape[0] - 2 * HIDDEN
    w1 = w[:k_pad]
    w2 = w[k_pad:k_pad + HIDDEN]
    w3 = w[k_pad + HIDDEN:]
    b1, b2, b3 = b[0], b[1], b[2]

    xp = jnp.pad(x, ((0, 0), (0, k_pad - x.shape[1]))).astype(jnp.bfloat16)
    dot = lambda a, m: jnp.dot(a, m, preferred_element_type=jnp.float32)
    h1 = jnp.maximum(dot(xp, w1) + b1, 0.0)
    h2 = jnp.maximum(dot(h1.astype(jnp.bfloat16), w2) + b2, 0.0)
    q = dot(h2.astype(jnp.bfloat16), w3) + b3
    return q[:, :n_actions]


if __name__ == "__main__":
    # CartPole-v1: 4 observations, 2 actions. Small deterministic batch.
    n_observations, n_actions, batch = 4, 2, 32

    key = jax.random.PRNGKey(0)
    k_params, k_x = jax.random.split(key)
    params = init_params(k_params, n_observations, n_actions)
    x = jax.random.normal(k_x, (batch, n_observations), jnp.float32)

    q_kernel = jax.block_until_ready(dqn_forward(x, params, n_actions=n_actions))
    q_ref = jax.block_until_ready(dqn_reference(x, params, n_actions))

    assert q_kernel.shape == (batch, n_actions)
    # bf16 activations + bf16 weights (mirrored in the reference) -> ~1e-2 tol.
    assert jnp.allclose(q_kernel, q_ref, atol=1e-2, rtol=1e-2), "mismatch vs reference"
    print("KERNEL_OK")
</pallas_src>

<mosaic_0001>
module attributes {stable_mosaic.version = 11 : i64} {
  func.func @dqn_kernel(%arg0: i32, %arg1: memref<32x8xf32, #tpu.memory_space<vmem>>, %arg2: memref<264x128xbf16, #tpu.memory_space<vmem>>, %arg3: memref<8x128xf32, #tpu.memory_space<vmem>>, %arg4: memref<32x128xf32, #tpu.memory_space<vmem>>) attributes {dimension_semantics = [#tpu.dimension_semantics<parallel>], iteration_bounds = array<i64: 1>, scalar_prefetch = 0 : i64, scratch_operands = 0 : i64, tpu.core_type = #tpu.core_type<tc>, window_params = [{transform_indices = @transform_0, window_bounds = array<i64: 32, 8>}, {pipeline_mode = #tpu.pipeline_mode<synchronous>, transform_indices = @transform_1, window_bounds = array<i64: 264, 128>}, {pipeline_mode = #tpu.pipeline_mode<synchronous>, transform_indices = @transform_2, window_bounds = array<i64: 8, 128>}, {transform_indices = @transform_3, window_bounds = array<i64: 32, 128>}]} {
    %c0 = arith.constant 0 : index
    %c0_0 = arith.constant 0 : index
    %0 = vector.load %arg1[%c0, %c0_0] : memref<32x8xf32, #tpu.memory_space<vmem>>, vector<32x8xf32>
    %1 = arith.truncf %0 : vector<32x8xf32> to vector<32x8xbf16>
    %c0_1 = arith.constant 0 : index
    %c0_2 = arith.constant 0 : index
    %2 = vector.load %arg2[%c0_1, %c0_2] : memref<264x128xbf16, #tpu.memory_space<vmem>>, vector<8x128xbf16>
    %c8 = arith.constant 8 : index
    %c0_3 = arith.constant 0 : index
    %3 = vector.load %arg2[%c8, %c0_3] : memref<264x128xbf16, #tpu.memory_space<vmem>>, vector<128x128xbf16>
    %c136 = arith.constant 136 : index
    %c0_4 = arith.constant 0 : index
    %4 = vector.load %arg2[%c136, %c0_4] : memref<264x128xbf16, #tpu.memory_space<vmem>>, vector<128x128xbf16>
    %c0_5 = arith.constant 0 : index
    %c0_6 = arith.constant 0 : index
    %5 = vector.load %arg3[%c0_5, %c0_6] : memref<8x128xf32, #tpu.memory_space<vmem>>, vector<1x128xf32>
    %c1 = arith.constant 1 : index
    %c0_7 = arith.constant 0 : index
    %6 = vector.load %arg3[%c1, %c0_7] : memref<8x128xf32, #tpu.memory_space<vmem>>, vector<1x128xf32>
    %c2 = arith.constant 2 : index
    %c0_8 = arith.constant 0 : index
    %7 = vector.load %arg3[%c2, %c0_8] : memref<8x128xf32, #tpu.memory_space<vmem>>, vector<1x128xf32>
    %cst = arith.constant dense<0.000000e+00> : vector<32x128xf32>
    %8 = tpu.matmul %1, %2, %cst {dimension_numbers = #tpu.dot_dimension_numbers<[1], [0], [0], [1], [0, 0, 1, 1], [], []>} : vector<32x8xbf16>, vector<8x128xbf16>, vector<32x128xf32> -> vector<32x128xf32>
    %9 = vector.broadcast %5 : vector<1x128xf32> to vector<32x128xf32>
    %10 = arith.addf %8, %9 : vector<32x128xf32>
    %cst_9 = arith.constant 0.000000e+00 : f32
    %11 = vector.broadcast %cst_9 : f32 to vector<32x128xf32>
    %12 = arith.maximumf %10, %11 : vector<32x128xf32>
    %13 = arith.truncf %12 : vector<32x128xf32> to vector<32x128xbf16>
    %cst_10 = arith.constant dense<0.000000e+00> : vector<32x128xf32>
    %14 = tpu.matmul %13, %3, %cst_10 {dimension_numbers = #tpu.dot_dimension_numbers<[1], [0], [0], [1], [0, 0, 1, 1], [], []>} : vector<32x128xbf16>, vector<128x128xbf16>, vector<32x128xf32> -> vector<32x128xf32>
    %15 = vector.broadcast %6 : vector<1x128xf32> to vector<32x128xf32>
    %16 = arith.addf %14, %15 : vector<32x128xf32>
    %cst_11 = arith.constant 0.000000e+00 : f32
    %17 = vector.broadcast %cst_11 : f32 to vector<32x128xf32>
    %18 = arith.maximumf %16, %17 : vector<32x128xf32>
    %19 = arith.truncf %18 : vector<32x128xf32> to vector<32x128xbf16>
    %cst_12 = arith.constant dense<0.000000e+00> : vector<32x128xf32>
    %20 = tpu.matmul %19, %4, %cst_12 {dimension_numbers = #tpu.dot_dimension_numbers<[1], [0], [0], [1], [0, 0, 1, 1], [], []>} : vector<32x128xbf16>, vector<128x128xbf16>, vector<32x128xf32> -> vector<32x128xf32>
    %21 = vector.broadcast %7 : vector<1x128xf32> to vector<32x128xf32>
    %22 = arith.addf %20, %21 : vector<32x128xf32>
    %c0_13 = arith.constant 0 : index
    %c0_14 = arith.constant 0 : index
    %23 = vector.load %arg4[%c0_13, %c0_14] : memref<32x128xf32, #tpu.memory_space<vmem>>, vector<32x128xf32>
    tpu.vector_store %arg4[%c0_13, %c0_14], %22 {strides = array<i32>} : memref<32x128xf32, #tpu.memory_space<vmem>>, vector<32x128xf32>,
    return
  }
  func.func @transform_0(%arg0: i32) -> (i32, i32) {
    %c0_i32 = arith.constant 0 : i32
    %c0_i32_0 = arith.constant 0 : i32
    return %arg0, %c0_i32 : i32, i32
  }
  func.func @transform_1(%arg0: i32) -> (i32, i32) {
    %c0_i32 = arith.constant 0 : i32
    %c0_i32_0 = arith.constant 0 : i32
    %c0_i32_1 = arith.constant 0 : i32
    return %c0_i32, %c0_i32_0 : i32, i32
  }
  func.func @transform_2(%arg0: i32) -> (i32, i32) {
    %c0_i32 = arith.constant 0 : i32
    %c0_i32_0 = arith.constant 0 : i32
    %c0_i32_1 = arith.constant 0 : i32
    return %c0_i32, %c0_i32_0 : i32, i32
  }
  func.func @transform_3(%arg0: i32) -> (i32, i32) {
    %c0_i32 = arith.constant 0 : i32
    %c0_i32_0 = arith.constant 0 : i32
    return %arg0, %c0_i32 : i32, i32
  }
}

</mosaic_0001>

<llo_original>
// kernel: dqn_forward.1
$region0: #{dqn_forward.1}
  #allocation0 [shape = 'u32[]', space=smem, size = 0x4, offset = 0x4, fixed_abs, tag = 'smem constant byte address 0x4 - core index']
  #allocation1 [shape = 'u32[144,128]{1,0:T(1,128)}', space=vmem, size = 0x12000, scoped, tag = 'internal scratch']
  %s0 = inlined_call_operand.vmem [shape: f32[32,8], index: 0, kind: input, shape index: {}]
  %s1 = inlined_call_operand.hbm [shape: bf16[264,128], index: 1, kind: input, shape index: {}]
  %s2 = inlined_call_operand.vmem [shape: f32[8,128], index: 2, kind: input, shape index: {}]
  %s3 = inlined_call_operand.vmem [shape: f32[32,128], index: 3, kind: output, shape index: {}]
  %s4 = sld [smem:[#allocation0]]
  $region26: #{dqn_forward.1} parent=0
    _
  %s6 = ssub.s32 1, %s4
  %s7 = scalar_select 0, %s6, %s4
  $region1: #{dqn_forward.1} parent=0
    #allocation2 [shape = 'u8[67584]{0}', space=vmem, size = 0x10800, scoped, tag = 'input window, operand 1, single buffered']
    #allocation3 [shape = 's32[1]{0}', space=sflag, size = 0x4, scoped, tag = 'scoped memory for dqn_forward.1']
    %8 = vsyncpa [#allocation3], 0
    // Predicated region
    $region2: #{dqn_forward.1} parent=1 // pred_check
      _
    $region3: #{dqn_forward.1} parent=1 // pred_check_branch
      %10 = sbr.rel (0) target = $region5
    $region4: #{dqn_forward.1} parent=1 // pred_region
      _
    $region5: #{dqn_forward.1} parent=1 // pred_fallthru
      _
    // Predicated region
    $region6: #{dqn_forward.1} parent=1 // pred_check
      _
    $region7: #{dqn_forward.1} parent=1 // pred_check_branch
      %12 = sbr.rel (0) target = $region9
    $region8: #{dqn_forward.1} parent=1 // pred_region
      %s14 = ssub.s32 2112, 2112
      %15 = vsyncadd [#allocation3], %s14
      %s16 = sshll.u32 [#allocation2], 4
      %s17 = int_to_ptr.vmem [resolvable:$true] %s16
      %22 = dma.hbm_to_vmem [thread:$0]  %s1, 2112, %s17, [#allocation3], 64, 64, 4
    $region9: #{dqn_forward.1} parent=1 // pred_fallthru
      _
    // Predicated region
    $region10: #{dqn_forward.1} parent=1 // pred_check
      _
    $region11: #{dqn_forward.1} parent=1 // pred_check_branch
      %24 = sbr.rel (0) target = $region13
    $region12: #{dqn_forward.1} parent=1 // pred_region
      _
    $region13: #{dqn_forward.1} parent=1 // pred_fallthru
      _
    // Predicated region
    $region14: #{dqn_forward.1} parent=1 // pred_check
      _
    $region15: #{dqn_forward.1} parent=1 // pred_check_branch
      %26 = sbr.rel (0) target = $region17
    $region16: #{dqn_forward.1} parent=1 // pred_region
      %27 = dma.done [#allocation3], 2112
    $region17: #{dqn_forward.1} parent=1 // pred_fallthru
      _
    %v29 = vld [vmem:[%s0] sm:$0xff]
    %v30 = vld [vmem:[%s0 + $0x8] sm:$0xff]
    %v31 = vld [vmem:[%s0 + $0x10] sm:$0xff]
    %v32 = vld [vmem:[%s0 + $0x18] sm:$0xff]
    %v33 = vpack.c.bf16 %v30, %v29
    %v34 = vpack.c.bf16 %v32, %v31
    %v35 = vld [vmem:[#allocation2] sm:$0xf]
    %v36 = vld [vmem:[#allocation2 + $0x4] sm:$0xf]
    %v37 = vld [vmem:[#allocation2 + $0x8] sm:$0xf]
    %v38 = vld [vmem:[#allocation2 + $0xc] sm:$0xf]
    %v39 = vld [vmem:[#allocation2 + $0x10] sm:$0xf]
    %v40 = vld [vmem:[#allocation2 + $0x14] sm:$0xf]
    %v41 = vld [vmem:[#allocation2 + $0x18] sm:$0xf]
    %v42 = vld [vmem:[#allocation2 + $0x1c] sm:$0xf]
    %v43 = vld [vmem:[#allocation2 + $0x20] sm:$0xf]
    %v44 = vld [vmem:[#allocation2 + $0x24] sm:$0xf]
    %v45 = vld [vmem:[#allocation2 + $0x28] sm:$0xf]
    %v46 = vld [vmem:[#allocation2 + $0x2c] sm:$0xf]
    %v47 = vld [vmem:[#allocation2 + $0x30] sm:$0xf]
    %v48 = vld [vmem:[#allocation2 + $0x34] sm:$0xf]
    %v49 = vld [vmem:[#allocation2 + $0x38] sm:$0xf]
    %v50 = vld [vmem:[#allocation2 + $0x3c] sm:$0xf]
    %v51 = vld [vmem:[#allocation2 + $0x40] sm:$0xf]
    %v52 = vld [vmem:[#allocation2 + $0x44] sm:$0xf]
    %v53 = vld [vmem:[#allocation2 + $0x48] sm:$0xf]
    %v54 = vld [vmem:[#allocation2 + $0x4c] sm:$0xf]
    %v55 = vld [vmem:[#allocation2 + $0x50] sm:$0xf]
    %v56 = vld [vmem:[#allocation2 + $0x54] sm:$0xf]
    %v57 = vld [vmem:[#allocation2 + $0x58] sm:$0xf]
    %v58 = vld [vmem:[#allocation2 + $0x5c] sm:$0xf]
    %v59 = vld [vmem:[#allocation2 + $0x60] sm:$0xf]
    %v60 = vld [vmem:[#allocation2 + $0x64] sm:$0xf]
    %v61 = vld [vmem:[#allocation2 + $0x68] sm:$0xf]
    %v62 = vld [vmem:[#allocation2 + $0x6c] sm:$0xf]
    %v63 = vld [vmem:[#allocation2 + $0x70] sm:$0xf]
    %v64 = vld [vmem:[#allocation2 + $0x74] sm:$0xf]
    %v65 = vld [vmem:[#allocation2 + $0x78] sm:$0xf]
    %v66 = vld [vmem:[#allocation2 + $0x7c] sm:$0xf]
    %v67 = vld [vmem:[#allocation2 + $0x80] sm:$0xf]
    %v68 = vld [vmem:[%s2] sm:$0x1]
    %v69 = vld [vmem:[%s2 + $0x1] sm:$0x1]
    %v70 = vld [vmem:[%s2 + $0x2] sm:$0x1]
    %v71 = vlaneseq
    %v72 = vshrl.u32 %v71, 7
    %v73 = vsub.s32 0, %v72
    %v74 = vrot.slane %v68, %v73
    %vm75 = vcmask 64512
    %v77 = vsel %vm75, %v33, 0
    %v80 = vsel %vm75, %v34, 0
    %vm82 = vcmask 1043456
    %v84 = vsel %vm82, %v35, 0
    %86 = vmatprep.subr.bf16.mxu0 0
    %87 = vmatpush1.bf16.msra.mxu0 %v84
    %88 = vmatprep.subr.bf16.mxu0 0
    %89 = vmatpush1.bf16.msra.mxu0 0
    %90 = vmatprep.subr.bf16.mxu0 0
    %91 = vmatpush1.bf16.msra.mxu0 0
    %92 = vmatprep.subr.bf16.mxu0 0
    %93 = vmatpush1.bf16.msra.mxu0 0
    %94 = vmatprep.subr.bf16.mxu0 0
    %95 = vmatpush1.bf16.msra.mxu0 0
    %96 = vmatprep.subr.bf16.mxu0 0
    %97 = vmatpush1.bf16.msra.mxu0 0
    %98 = vmatprep.subr.bf16.mxu0 0
    %99 = vmatpush1.bf16.msra.mxu0 0
    %100 = vmatprep.subr.bf16.mxu0 0
    %101 = vmatpush1.bf16.msra.mxu0 0
    %102 = vmatprep.subr.bf16.mxu0 0
    %103 = vmatpush1.bf16.msra.mxu0 0
    %104 = vmatprep.subr.bf16.mxu0 0
    %105 = vmatpush1.bf16.msra.mxu0 0
    %106 = vmatprep.subr.bf16.mxu0 0
    %107 = vmatpush1.bf16.msra.mxu0 0
    %108 = vmatprep.subr.bf16.mxu0 0
    %109 = vmatpush1.bf16.msra.mxu0 0
    %110 = vmatprep.subr.bf16.mxu0 0
    %111 = vmatpush1.bf16.msra.mxu0 0
    %112 = vmatprep.subr.bf16.mxu0 0
    %113 = vmatpush1.bf16.msra.mxu0 0
    %114 = vmatprep.subr.bf16.mxu0 0
    %115 = vmatpush1.bf16.msra.mxu0 0
    %116 = vmatprep.subr.bf16.mxu0 0
    %117 = vmatpush1.bf16.msra.mxu0 0
    %118 = vmatprep.mubr.bf16.mxu0 0
    %119 = vmatmul.mubr.bf16.gmra.mrb[0].mxu0 %v77
    %v120 = vpop.f32.mrb[0].mxu0
    %v121 = vadd.f32 %v74, %v120
    %v122 = vpop.f32.mrb[0].mxu0
    %v123 = vpop.f32.mrb[0].mxu0
    %v124 = vadd.f32 %v74, %v123
    %v125 = vpop.f32.mrb[0].mxu0
    %126 = vmatprep.mubr.bf16.mxu0 0
    %127 = vmatmul.mubr.bf16.gmra.mrb[0].mxu0 %v80
    %v128 = vpop.f32.mrb[0].mxu0
    %v129 = vadd.f32 %v74, %v128
    %v130 = vpop.f32.mrb[0].mxu0
    %v131 = vpop.f32.mrb[0].mxu0
    %v132 = vadd.f32 %v74, %v131
    %v133 = vpop.f32.mrb[0].mxu0
    %134 = vdwg.mxu0
    %v135 = vmax.f32 %v121, 0.0
    %v136 = vmax.f32 %v124, 0.0
    %v137 = vmax.f32 %v129, 0.0
    %v138 = vmax.f32 %v132, 0.0
    %v139 = vpack.c.bf16 %v136, %v135
    %v140 = vpack.c.bf16 %v138, %v137
    %v141 = vlaneseq
    %v142 = vshrl.u32 %v141, 7
    %v143 = vsub.s32 0, %v142
    %v144 = vrot.slane %v69, %v143
    %v161 = vunpack.c.l.b16 %v36
    %v162 = vunpack.c.l.b16 %v37
    %v163 = vunpack.c.l.b16 %v38
    %v164 = vunpack.c.l.b16 %v39
    %v165 = vunpack.c.l.b16 %v40
    %v166 = vunpack.c.l.b16 %v41
    %v167 = vunpack.c.l.b16 %v42
    %v168 = vunpack.c.l.b16 %v43
    %v169 = vunpack.c.l.b16 %v44
    %v170 = vunpack.c.l.b16 %v45
    %v171 = vunpack.c.l.b16 %v46
    %v172 = vunpack.c.l.b16 %v47
    %v173 = vunpack.c.l.b16 %v48
    %v174 = vunpack.c.l.b16 %v49
    %v175 = vunpack.c.l.b16 %v50
    %v176 = vunpack.c.l.b16 %v51
    %v177 = vpack.c.b16 %v162, %v161
    %v178 = vpack.c.b16 %v164, %v163
    %v179 = vpack.c.b16 %v166, %v165
    %v180 = vpack.c.b16 %v168, %v167
    %v181 = vpack.c.b16 %v170, %v169
    %v182 = vpack.c.b16 %v172, %v171
    %v183 = vpack.c.b16 %v174, %v173
    %v184 = vpack.c.b16 %v176, %v175
    %193 = vmatprep.subr.bf16.mxu0 0
    %194 = vmatpush1.bf16.msra.mxu0 %v177
    %195 = vmatprep.subr.bf16.mxu0 0
    %196 = vmatpush1.bf16.msra.mxu0 %v178
    %197 = vmatprep.subr.bf16.mxu0 0
    %198 = vmatpush1.bf16.msra.mxu0 %v179
    %199 = vmatprep.subr.bf16.mxu0 0
    %200 = vmatpush1.bf16.msra.mxu0 %v180
    %201 = vmatprep.subr.bf16.mxu0 0
    %202 = vmatpush1.bf16.msra.mxu0 %v181
    %203 = vmatprep.subr.bf16.mxu0 0
    %204 = vmatpush1.bf16.msra.mxu0 %v182
    %205 = vmatprep.subr.bf16.mxu0 0
    %206 = vmatpush1.bf16.msra.mxu0 %v183
    %207 = vmatprep.subr.bf16.mxu0 0
    %208 = vmatpush1.bf16.msra.mxu0 %v184
    %209 = vmatprep.subr.bf16.mxu0 0
    %210 = vmatpush1.bf16.msra.mxu0 0
    %211 = vmatprep.subr.bf16.mxu0 0
    %212 = vmatpush1.bf16.msra.mxu0 0
    %213 = vmatprep.subr.bf16.mxu0 0
    %214 = vmatpush1.bf16.msra.mxu0 0
    %215 = vmatprep.subr.bf16.mxu0 0
    %216 = vmatpush1.bf16.msra.mxu0 0
    %217 = vmatprep.subr.bf16.mxu0 0
    %218 = vmatpush1.bf16.msra.mxu0 0
    %219 = vmatprep.subr.bf16.mxu0 0
    %220 = vmatpush1.bf16.msra.mxu0 0
    %221 = vmatprep.subr.bf16.mxu0 0
    %222 = vmatpush1.bf16.msra.mxu0 0
    %223 = vmatprep.subr.bf16.mxu0 0
    %224 = vmatpush1.bf16.msra.mxu0 0
    %225 = vmatprep.mubr.bf16.mxu0 0
    %226 = vmatmul.mubr.bf16.gmra.mrb[0].mxu0 %v139
    %v227 = vpop.f32.mrb[0].mxu0
    %v228 = vadd.f32 %v144, %v227
    %v229 = vpop.f32.mrb[0].mxu0
    %v230 = vpop.f32.mrb[0].mxu0
    %v231 = vadd.f32 %v144, %v230
    %v232 = vpop.f32.mrb[0].mxu0
    %233 = vmatprep.mubr.bf16.mxu0 0
    %234 = vmatmul.mubr.bf16.gmra.mrb[0].mxu0 %v140
    %v235 = vpop.f32.mrb[0].mxu0
    %v236 = vadd.f32 %v144, %v235
    %v237 = vpop.f32.mrb[0].mxu0
    %v238 = vpop.f32.mrb[0].mxu0
    %v239 = vadd.f32 %v144, %v238
    %v240 = vpop.f32.mrb[0].mxu0
    %241 = vdwg.mxu0
    %v242 = vmax.f32 %v228, 0.0
    %v243 = vmax.f32 %v231, 0.0
    %v244 = vmax.f32 %v236, 0.0
    %v245 = vmax.f32 %v239, 0.0
    %v246 = vpack.c.bf16 %v243, %v242
    %v247 = vpack.c.bf16 %v245, %v244
    %v248 = vlaneseq
    %v249 = vshrl.u32 %v248, 7
    %v250 = vsub.s32 0, %v249
    %v251 = vrot.slane %v70, %v250
    %v268 = vunpack.c.l.b16 %v52
    %v269 = vunpack.c.l.b16 %v53
    %v270 = vunpack.c.l.b16 %v54
    %v271 = vunpack.c.l.b16 %v55
    %v272 = vunpack.c.l.b16 %v56
    %v273 = vunpack.c.l.b16 %v57
    %v274 = vunpack.c.l.b16 %v58
    %v275 = vunpack.c.l.b16 %v59
    %v276 = vunpack.c.l.b16 %v60
    %v277 = vunpack.c.l.b16 %v61
    %v278 = vunpack.c.l.b16 %v62
    %v279 = vunpack.c.l.b16 %v63
    %v280 = vunpack.c.l.b16 %v64
    %v281 = vunpack.c.l.b16 %v65
    %v282 = vunpack.c.l.b16 %v66
    %v283 = vunpack.c.l.b16 %v67
    %v284 = vpack.c.b16 %v269, %v268
    %v285 = vpack.c.b16 %v271, %v270
    %v286 = vpack.c.b16 %v273, %v272
    %v287 = vpack.c.b16 %v275, %v274
    %v288 = vpack.c.b16 %v277, %v276
    %v289 = vpack.c.b16 %v279, %v278
    %v290 = vpack.c.b16 %v281, %v280
    %v291 = vpack.c.b16 %v283, %v282
    %300 = vmatprep.subr.bf16.mxu0 0
    %301 = vmatpush1.bf16.msra.mxu0 %v284
    %302 = vmatprep.subr.bf16.mxu0 0
    %303 = vmatpush1.bf16.msra.mxu0 %v285
    %304 = vmatprep.subr.bf16.mxu0 0
    %305 = vmatpush1.bf16.msra.mxu0 %v286
    %306 = vmatprep.subr.bf16.mxu0 0
    %307 = vmatpush1.bf16.msra.mxu0 %v287
    %308 = vmatprep.subr.bf16.mxu0 0
    %309 = vmatpush1.bf16.msra.mxu0 %v288
    %310 = vmatprep.subr.bf16.mxu0 0
    %311 = vmatpush1.bf16.msra.mxu0 %v289
    %312 = vmatprep.subr.bf16.mxu0 0
    %313 = vmatpush1.bf16.msra.mxu0 %v290
    %314 = vmatprep.subr.bf16.mxu0 0
    %315 = vmatpush1.bf16.msra.mxu0 %v291
    %316 = vmatprep.subr.bf16.mxu0 0
    %317 = vmatpush1.bf16.msra.mxu0 0
    %318 = vmatprep.subr.bf16.mxu0 0
    %319 = vmatpush1.bf16.msra.mxu0 0
    %320 = vmatprep.subr.bf16.mxu0 0
    %321 = vmatpush1.bf16.msra.mxu0 0
    %322 = vmatprep.subr.bf16.mxu0 0
    %323 = vmatpush1.bf16.msra.mxu0 0
    %324 = vmatprep.subr.bf16.mxu0 0
    %325 = vmatpush1.bf16.msra.mxu0 0
    %326 = vmatprep.subr.bf16.mxu0 0
    %327 = vmatpush1.bf16.msra.mxu0 0
    %328 = vmatprep.subr.bf16.mxu0 0
    %329 = vmatpush1.bf16.msra.mxu0 0
    %330 = vmatprep.subr.bf16.mxu0 0
    %331 = vmatpush1.bf16.msra.mxu0 0
    %332 = vmatprep.mubr.bf16.mxu0 0
    %333 = vmatmul.mubr.bf16.gmra.mrb[0].mxu0 %v246
    %v334 = vpop.f32.mrb[0].mxu0
    %v335 = vadd.f32 %v251, %v334
    %v336 = vpop.f32.mrb[0].mxu0
    %v337 = vpop.f32.mrb[0].mxu0
    %v338 = vadd.f32 %v251, %v337
    %v339 = vpop.f32.mrb[0].mxu0
    %340 = vmatprep.mubr.bf16.mxu0 0
    %341 = vmatmul.mubr.bf16.gmra.mrb[0].mxu0 %v247
    %v342 = vpop.f32.mrb[0].mxu0
    %v343 = vadd.f32 %v251, %v342
    %v344 = vpop.f32.mrb[0].mxu0
    %v345 = vpop.f32.mrb[0].mxu0
    %v346 = vadd.f32 %v251, %v345
    %v347 = vpop.f32.mrb[0].mxu0
    %348 = vdwg.mxu0
    %349 = vst [vmem:[%s3] sm:$0xff] %v335
    %350 = vst [vmem:[%s3 + $0x8] sm:$0xff] %v338
    %351 = vst [vmem:[%s3 + $0x10] sm:$0xff] %v343
    %352 = vst [vmem:[%s3 + $0x18] sm:$0xff] %v346
    // Predicated region
    $region18: #{dqn_forward.1} parent=1 // pred_check
      _
    $region19: #{dqn_forward.1} parent=1 // pred_check_branch
      %354 = sbr.rel (0) target = $region21
    $region20: #{dqn_forward.1} parent=1 // pred_region
      _
    $region21: #{dqn_forward.1} parent=1 // pred_fallthru
      _
    // Predicated region
    $region22: #{dqn_forward.1} parent=1 // pred_check
      _
    $region23: #{dqn_forward.1} parent=1 // pred_check_branch
      %356 = sbr.rel (0) target = $region25
    $region24: #{dqn_forward.1} parent=1 // pred_region
      _
    $region25: #{dqn_forward.1} parent=1 // pred_fallthru
      _
    %357 = vsyncpa [#allocation3], 1

</llo_original>
